<compile_context>
chip_gen: v5e
topology: v5e:2x2
jax: 0.10.0
libtpu: 0.0.40
codegen_flags: <defaults>
</compile_context>

<pallas_src>
import functools

import jax
import jax.numpy as jnp
from jax.experimental import pallas as pl
from jax.experimental.pallas import tpu as pltpu


def _distill_kernel(student_ref, teacher_ref, labels_ref, out_ref,
                    hard_acc, kl_acc, *, T, B, TB, TPC, needs_mask, exp_dtype):
    c = pl.program_id(0)          # core-split axis ("parallel")
    j = pl.program_id(1)          # batch-tile axis ("arbitrary", serial per core)
    nj = pl.num_programs(1)

    @pl.when(j == 0)
    def _():
        hard_acc[...] = jnp.zeros_like(hard_acc)
        kl_acc[...] = jnp.zeros_like(kl_acc)

    s = student_ref[...].astype(jnp.float32)   # (TB, C) student logits (f32 compute)
    t = teacher_ref[...].astype(jnp.float32)   # (TB, C) teacher logits
    labels = labels_ref[...]                   # (TB, 1) int32
    tb, C = s.shape
    inv_T = jnp.float32(1.0 / T)

    if needs_mask:
        # Ragged / phantom tile handling. Sanitize BEFORE any exp/log so garbage
        # rows (partial last tile, or clamped phantom tiles on the core split)
        # cannot produce NaN/Inf; their rows are zeroed out at the end anyway.
        tile_idx = c * TPC + j     # un-clamped tile index
        row_ids = tile_idx * TB + jax.lax.broadcasted_iota(jnp.int32, (tb, 1), 0)
        valid = row_ids < B
        validf = valid.astype(jnp.float32)
        s = jnp.where(valid, s, 0.0)
        t = jnp.where(valid, t, 0.0)

    # Lane-sum reductions routed to the (otherwise idle) MXU.
    ones_c = jnp.ones((C, 1), jnp.float32)

    def rowsum(x):
        return jnp.dot(x, ones_c, preferred_element_type=jnp.float32)

    # ---- hard loss partial: sum over rows of (lse(s) - s[label]) ------------
    s_max = jnp.max(s, axis=1, keepdims=True)                        # (TB, 1) XLU
    d = s - s_max                                                    # (TB, C)
    e_d = jnp.exp(d.astype(exp_dtype)).astype(jnp.float32)           # exp #1
    s_lse = jnp.log(rowsum(e_d)) + s_max                             # (TB, 1)
    class_ids = jax.lax.broadcasted_iota(jnp.int32, (tb, C), 1)
    picked = rowsum(jnp.where(class_ids == labels, s, 0.0))          # (TB, 1)
    hard_row = s_lse - picked                                        # (TB, 1)

    # ---- soft loss partial: KL(softmax(t/T) || softmax(s/T)) per row --------
    #   kl_row = sum(p_t * (t - s)) / T - (tt_lse - st_lse)
    # Reuse d for the student/T lse; reuse e_tt for p_t (no 4th exp).
    e_st = jnp.exp((d * inv_T).astype(exp_dtype)).astype(jnp.float32)    # exp #2
    st_lse = jnp.log(rowsum(e_st)) + s_max * inv_T
    t_max = jnp.max(t, axis=1, keepdims=True)                            # XLU
    e_tt = jnp.exp(((t - t_max) * inv_T).astype(exp_dtype)).astype(jnp.float32)  # exp #3
    sum_e_tt = rowsum(e_tt)
    tt_lse = jnp.log(sum_e_tt) + t_max * inv_T
    # sum(p_t * (t - s)) == sum(e_tt * (t - s)) / sum(e_tt); exact divide on a
    # (TB,1) vector (approx reciprocal dropped per correctness review).
    kl_dot = (rowsum(e_tt * (t - s)) / sum_e_tt) * inv_T                 # (TB, 1)
    kl_row = kl_dot - (tt_lse - st_lse)                                  # (TB, 1)

    if needs_mask:
        hard_row = hard_row * validf
        kl_row = kl_row * validf

    # Per-tile (1,1) partial sums into the per-core resident accumulators.
    hard_acc[...] += jnp.sum(hard_row, axis=0, keepdims=True)
    kl_acc[...] += jnp.sum(kl_row, axis=0, keepdims=True)

    # Finalize: write this core's partial sums once into its (8,128) out block.
    @pl.when(j == nj - 1)
    def _():
        rows8 = jax.lax.broadcasted_iota(jnp.int32, (8, 128), 0)
        cols = jax.lax.broadcasted_iota(jnp.int32, (8, 128), 1)
        blk = (jnp.where((rows8 == 0) & (cols == 0), hard_acc[...], 0.0)
               + jnp.where((rows8 == 0) & (cols == 1), kl_acc[...], 0.0))
        out_ref[0, :, :] = blk


def _chip_vmem_bytes():
    """(vmem_capacity_bytes, detected). Conservative default when unavailable."""
    try:
        return int(pltpu.get_tpu_info().vmem_capacity_bytes), True
    except Exception:
        return 64 * 1024 * 1024, False


def _pick_batch_tile(B, C, target_f32_tile_bytes):
    """Largest batch tile whose (TB, C) f32 working tile stays near the target."""
    rows = max(8, target_f32_tile_bytes // max(C * 4, 1))
    rows = min(rows, 1024)
    rows = max((rows // 8) * 8, 8)
    if B <= rows:
        return B          # full batch in one tile (block == full dim is legal)
    return rows


def distillation_loss(student_output, teacher_output, true_labels, *, T=2.0, alpha=0.5):
    """Pallas TPU implementation of DistillationLoss.forward (scalar loss).

    student_output/teacher_output may be f32 or bf16 (bf16 halves HBM traffic;
    compute is always f32 inside the kernel).
    """
    B, C = student_output.shape
    labels_2d = true_labels.astype(jnp.int32).reshape(B, 1)   # glue: reshape only

    vmem_cap, detected = _chip_vmem_bytes()
    small_vmem = detected and vmem_cap <= 96 * 1024 * 1024    # v7x-class (64 MiB/TC)

    target_f32_tile = (2 if small_vmem else 4) * 1024 * 1024
    TB = _pick_batch_tile(B, C, target_f32_tile)
    tiles = -(-B // TB)

    # Core split: 2 "parallel" slices of the batch-tile loop (both TCs on v7x;
    # harmless / sequential on single-TC chips).
    NC = 2 if tiles >= 2 else 1
    TPC = -(-tiles // NC)                     # tiles per core (padded)
    needs_mask = (NC * TPC * TB != B)         # ragged last tile or phantom tile

    itemsize = jnp.dtype(student_output.dtype).itemsize
    f32_tile_bytes = TB * C * 4
    in_tile_bytes = TB * C * itemsize
    base_limit = (48 if (small_vmem or not detected) else 64) * 1024 * 1024
    est = 4 * in_tile_bytes + 8 * f32_tile_bytes + (1 << 20)  # bufs + temporaries
    cap = int(vmem_cap * 0.85)
    vmem_limit = int(min(max(base_limit, est), cap))

    # bf16 EUP exps only where the EUP is a plausible binding slot (v7x-class);
    # f32 everywhere else (v5e has no bf16 EUP, and f32 preserves reference parity).
    exp_dtype = jnp.bfloat16 if small_vmem else jnp.float32

    kernel = functools.partial(
        _distill_kernel, T=float(T), B=int(B), TB=int(TB), TPC=int(TPC),
        needs_mask=bool(needs_mask), exp_dtype=exp_dtype)

    def tile_map(c, j):
        ti = c * TPC + j
        return (jnp.minimum(ti, tiles - 1), 0)   # clamp phantom tiles (masked in-kernel)

    partials = pl.pallas_call(
        kernel,
        out_shape=jax.ShapeDtypeStruct((NC, 8, 128), jnp.float32),
        grid_spec=pltpu.PrefetchScalarGridSpec(
            num_scalar_prefetch=0,
            grid=(NC, TPC),
            in_specs=[
                pl.BlockSpec((TB, C), tile_map),
                pl.BlockSpec((TB, C), tile_map),
                pl.BlockSpec((TB, 1), tile_map),
            ],
            out_specs=pl.BlockSpec((1, 8, 128), lambda c, j: (c, 0, 0)),
            scratch_shapes=[
                pltpu.VMEM((1, 1), jnp.float32),   # per-core hard-loss accumulator
                pltpu.VMEM((1, 1), jnp.float32),   # per-core soft (KL) accumulator
            ],
        ),
        compiler_params=pltpu.CompilerParams(
            dimension_semantics=("parallel", "arbitrary"),
            vmem_limit_bytes=vmem_limit,
        ),
        cost_estimate=pl.CostEstimate(
            flops=int(24 * B * C),
            transcendentals=int(3 * B * C),
            bytes_accessed=int(2 * B * C * itemsize + B * 4 + NC * 8 * 128 * 4),
        ),
    )(student_output, teacher_output, labels_2d)

    # Tiny scalar finalize in the wrapper (per-core partials -> scalar loss).
    hard_sum = jnp.sum(partials[:, 0, 0])
    kl_sum = jnp.sum(partials[:, 0, 1])
    hard_loss = hard_sum / jnp.float32(B)
    soft_loss = kl_sum / jnp.float32(B * C)    # KLDivLoss 'mean' = /(B*C), no T^2
    return jnp.float32(alpha) * soft_loss + jnp.float32(1.0 - alpha) * hard_loss


if __name__ == "__main__":
    key = jax.random.PRNGKey(0)
    k1, k2, k3 = jax.random.split(key, 3)

    B, C = 8, 32   # small batch of logits over 32 classes
    student = jax.random.normal(k1, (B, C), dtype=jnp.float32)
    teacher = jax.random.normal(k2, (B, C), dtype=jnp.float32)
    labels = jax.random.randint(k3, (B,), 0, C, dtype=jnp.int32)

    # f32 path (matches the PyTorch reference dtype).
    loss = distillation_loss(student, teacher, labels, T=2.0, alpha=0.5)
    jax.block_until_ready(loss)

    # bf16-streamed logits path (halves HBM traffic; compute stays f32 in-kernel).
    loss_bf16 = distillation_loss(student.astype(jnp.bfloat16),
                                  teacher.astype(jnp.bfloat16),
                                  labels, T=2.0, alpha=0.5)
    jax.block_until_ready(loss_bf16)

    print("KERNEL_OK")
</pallas_src>

<mosaic_0001>
module attributes {stable_mosaic.version = 11 : i64} {
  func.func @_distill_kernel(%arg0: i32, %arg1: i32, %arg2: memref<8x32xf32, #tpu.memory_space<vmem>>, %arg3: memref<8x32xf32, #tpu.memory_space<vmem>>, %arg4: memref<8x1xi32, #tpu.memory_space<vmem>>, %arg5: memref<1x8x128xf32, #tpu.memory_space<vmem>>, %arg6: memref<1x1xf32, #tpu.memory_space<vmem>>, %arg7: memref<1x1xf32, #tpu.memory_space<vmem>>) attributes {dimension_semantics = [#tpu.dimension_semantics<parallel>, #tpu.dimension_semantics<arbitrary>], iteration_bounds = array<i64: 1, 1>, scalar_prefetch = 0 : i64, scratch_operands = 2 : i64, tpu.core_type = #tpu.core_type<tc>, window_params = [{transform_indices = @transform_0, window_bounds = array<i64: 8, 32>}, {transform_indices = @transform_1, window_bounds = array<i64: 8, 32>}, {transform_indices = @transform_2, window_bounds = array<i64: 8, 1>}, {transform_indices = @transform_3, window_bounds = array<i64: 1, 8, 128>}]} {
    %c0_i32 = arith.constant 0 : i32
    %0 = arith.cmpi eq, %arg1, %c0_i32 : i32
    %1 = arith.extui %0 : i1 to i32
    %c0_i32_0 = arith.constant 0 : i32
    %2 = arith.cmpi ne, %1, %c0_i32_0 : i32
    scf.if %2 {
      %cst_31 = arith.constant 0.000000e+00 : f32
      %63 = vector.broadcast %cst_31 : f32 to vector<1x1xf32>
      %c0_32 = arith.constant 0 : index
      %c0_33 = arith.constant 0 : index
      %64 = vector.load %arg6[%c0_32, %c0_33] : memref<1x1xf32, #tpu.memory_space<vmem>>, vector<1x1xf32>
      tpu.vector_store %arg6[%c0_32, %c0_33], %63 {strides = array<i32>} : memref<1x1xf32, #tpu.memory_space<vmem>>, vector<1x1xf32>,
      %cst_34 = arith.constant 0.000000e+00 : f32
      %65 = vector.broadcast %cst_34 : f32 to vector<1x1xf32>
      %c0_35 = arith.constant 0 : index
      %c0_36 = arith.constant 0 : index
      %66 = vector.load %arg7[%c0_35, %c0_36] : memref<1x1xf32, #tpu.memory_space<vmem>>, vector<1x1xf32>
      tpu.vector_store %arg7[%c0_35, %c0_36], %65 {strides = array<i32>} : memref<1x1xf32, #tpu.memory_space<vmem>>, vector<1x1xf32>,
    } else {
    }
    %c0 = arith.constant 0 : index
    %c0_1 = arith.constant 0 : index
    %3 = vector.load %arg2[%c0, %c0_1] : memref<8x32xf32, #tpu.memory_space<vmem>>, vector<8x32xf32>
    %c0_2 = arith.constant 0 : index
    %c0_3 = arith.constant 0 : index
    %4 = vector.load %arg3[%c0_2, %c0_3] : memref<8x32xf32, #tpu.memory_space<vmem>>, vector<8x32xf32>
    %c0_4 = arith.constant 0 : index
    %c0_5 = arith.constant 0 : index
    %5 = vector.load %arg4[%c0_4, %c0_5] : memref<8x1xi32, #tpu.memory_space<vmem>>, vector<8x1xi32>
    %cst = arith.constant 1.000000e+00 : f32
    %6 = vector.broadcast %cst : f32 to vector<32x1xf32>
    %cst_6 = arith.constant dense<0xFF800000> : vector<8xf32>
    %7 = vector.multi_reduction <maximumf>, %3, %cst_6 [1] : vector<8x32xf32> to vector<8xf32>
    %8 = vector.shape_cast %7 : vector<8xf32> to vector<8x1xf32>
    %9 = vector.broadcast %8 : vector<8x1xf32> to vector<8x32xf32>
    %10 = arith.subf %3, %9 : vector<8x32xf32>
    %11 = math.exp %10 : vector<8x32xf32>
    %cst_7 = arith.constant dense<0.000000e+00> : vector<8x1xf32>
    %12 = tpu.matmul %11, %6, %cst_7 {dimension_numbers = #tpu.dot_dimension_numbers<[1], [0], [0], [1], [0, 0, 1, 1], [], []>} : vector<8x32xf32>, vector<32x1xf32>, vector<8x1xf32> -> vector<8x1xf32>
    %13 = math.log %12 : vector<8x1xf32>
    %14 = arith.addf %13, %8 : vector<8x1xf32>
    %15 = tpu.iota {dimensions = array<i32: 1>} : vector<8x32xi32>
    %16 = vector.broadcast %5 : vector<8x1xi32> to vector<8x32xi32>
    %17 = arith.cmpi eq, %15, %16 : vector<8x32xi32>
    %cst_8 = arith.constant 0.000000e+00 : f32
    %18 = vector.broadcast %cst_8 : f32 to vector<8x32xf32>
    %19 = arith.select %17, %3, %18 : vector<8x32xi1>, vector<8x32xf32>
    %cst_9 = arith.constant dense<0.000000e+00> : vector<8x1xf32>
    %20 = tpu.matmul %19, %6, %cst_9 {dimension_numbers = #tpu.dot_dimension_numbers<[1], [0], [0], [1], [0, 0, 1, 1], [], []>} : vector<8x32xf32>, vector<32x1xf32>, vector<8x1xf32> -> vector<8x1xf32>
    %21 = arith.subf %14, %20 : vector<8x1xf32>
    %cst_10 = arith.constant 5.000000e-01 : f32
    %22 = vector.broadcast %cst_10 : f32 to vector<8x32xf32>
    %23 = arith.mulf %10, %22 : vector<8x32xf32>
    %24 = math.exp %23 : vector<8x32xf32>
    %cst_11 = arith.constant dense<0.000000e+00> : vector<8x1xf32>
    %25 = tpu.matmul %24, %6, %cst_11 {dimension_numbers = #tpu.dot_dimension_numbers<[1], [0], [0], [1], [0, 0, 1, 1], [], []>} : vector<8x32xf32>, vector<32x1xf32>, vector<8x1xf32> -> vector<8x1xf32>
    %26 = math.log %25 : vector<8x1xf32>
    %cst_12 = arith.constant 5.000000e-01 : f32
    %27 = vector.broadcast %cst_12 : f32 to vector<8x1xf32>
    %28 = arith.mulf %8, %27 : vector<8x1xf32>
    %29 = arith.addf %26, %28 : vector<8x1xf32>
    %cst_13 = arith.constant dense<0xFF800000> : vector<8xf32>
    %30 = vector.multi_reduction <maximumf>, %4, %cst_13 [1] : vector<8x32xf32> to vector<8xf32>
    %31 = vector.shape_cast %30 : vector<8xf32> to vector<8x1xf32>
    %32 = vector.broadcast %31 : vector<8x1xf32> to vector<8x32xf32>
    %33 = arith.subf %4, %32 : vector<8x32xf32>
    %cst_14 = arith.constant 5.000000e-01 : f32
    %34 = vector.broadcast %cst_14 : f32 to vector<8x32xf32>
    %35 = arith.mulf %33, %34 : vector<8x32xf32>
    %36 = math.exp %35 : vector<8x32xf32>
    %cst_15 = arith.constant dense<0.000000e+00> : vector<8x1xf32>
    %37 = tpu.matmul %36, %6, %cst_15 {dimension_numbers = #tpu.dot_dimension_numbers<[1], [0], [0], [1], [0, 0, 1, 1], [], []>} : vector<8x32xf32>, vector<32x1xf32>, vector<8x1xf32> -> vector<8x1xf32>
    %38 = math.log %37 : vector<8x1xf32>
    %cst_16 = arith.constant 5.000000e-01 : f32
    %39 = vector.broadcast %cst_16 : f32 to vector<8x1xf32>
    %40 = arith.mulf %31, %39 : vector<8x1xf32>
    %41 = arith.addf %38, %40 : vector<8x1xf32>
    %42 = arith.subf %4, %3 : vector<8x32xf32>
    %43 = arith.mulf %36, %42 : vector<8x32xf32>
    %cst_17 = arith.constant dense<0.000000e+00> : vector<8x1xf32>
    %44 = tpu.matmul %43, %6, %cst_17 {dimension_numbers = #tpu.dot_dimension_numbers<[1], [0], [0], [1], [0, 0, 1, 1], [], []>} : vector<8x32xf32>, vector<32x1xf32>, vector<8x1xf32> -> vector<8x1xf32>
    %45 = arith.divf %44, %37 : vector<8x1xf32>
    %cst_18 = arith.constant 5.000000e-01 : f32
    %46 = vector.broadcast %cst_18 : f32 to vector<8x1xf32>
    %47 = arith.mulf %45, %46 : vector<8x1xf32>
    %48 = arith.subf %41, %29 : vector<8x1xf32>
    %49 = arith.subf %47, %48 : vector<8x1xf32>
    %c0_19 = arith.constant 0 : index
    %c0_20 = arith.constant 0 : index
    %50 = vector.load %arg6[%c0_19, %c0_20] : memref<1x1xf32, #tpu.memory_space<vmem>>, vector<1x1xf32>
    %cst_21 = arith.constant dense<0.000000e+00> : vector<1xf32>
    %51 = vector.multi_reduction <add>, %21, %cst_21 [0] : vector<8x1xf32> to vector<1xf32>
    %52 = vector.shape_cast %51 : vector<1xf32> to vector<1x1xf32>
    %53 = arith.addf %50, %52 : vector<1x1xf32>
    %c0_22 = arith.constant 0 : index
    %c0_23 = arith.constant 0 : index
    %54 = vector.load %arg6[%c0_22, %c0_23] : memref<1x1xf32, #tpu.memory_space<vmem>>, vector<1x1xf32>
    tpu.vector_store %arg6[%c0_22, %c0_23], %53 {strides = array<i32>} : memref<1x1xf32, #tpu.memory_space<vmem>>, vector<1x1xf32>,
    %c0_24 = arith.constant 0 : index
    %c0_25 = arith.constant 0 : index
    %55 = vector.load %arg7[%c0_24, %c0_25] : memref<1x1xf32, #tpu.memory_space<vmem>>, vector<1x1xf32>
    %cst_26 = arith.constant dense<0.000000e+00> : vector<1xf32>
    %56 = vector.multi_reduction <add>, %49, %cst_26 [0] : vector<8x1xf32> to vector<1xf32>
    %57 = vector.shape_cast %56 : vector<1xf32> to vector<1x1xf32>
    %58 = arith.addf %55, %57 : vector<1x1xf32>
    %c0_27 = arith.constant 0 : index
    %c0_28 = arith.constant 0 : index
    %59 = vector.load %arg7[%c0_27, %c0_28] : memref<1x1xf32, #tpu.memory_space<vmem>>, vector<1x1xf32>
    tpu.vector_store %arg7[%c0_27, %c0_28], %58 {strides = array<i32>} : memref<1x1xf32, #tpu.memory_space<vmem>>, vector<1x1xf32>,
    %c0_i32_29 = arith.constant 0 : i32
    %60 = arith.cmpi eq, %arg1, %c0_i32_29 : i32
    %61 = arith.extui %60 : i1 to i32
    %c0_i32_30 = arith.constant 0 : i32
    %62 = arith.cmpi ne, %61, %c0_i32_30 : i32
    scf.if %62 {
      %63 = tpu.iota {dimensions = array<i32: 0>} : vector<8x128xi32>
      %64 = tpu.iota {dimensions = array<i32: 1>} : vector<8x128xi32>
      %c0_i32_31 = arith.constant 0 : i32
      %65 = vector.broadcast %c0_i32_31 : i32 to vector<8x128xi32>
      %66 = arith.cmpi eq, %63, %65 : vector<8x128xi32>
      %c0_i32_32 = arith.constant 0 : i32
      %67 = vector.broadcast %c0_i32_32 : i32 to vector<8x128xi32>
      %68 = arith.cmpi eq, %64, %67 : vector<8x128xi32>
      %69 = arith.andi %66, %68 : vector<8x128xi1>
      %c0_33 = arith.constant 0 : index
      %c0_34 = arith.constant 0 : index
      %70 = vector.load %arg6[%c0_33, %c0_34] : memref<1x1xf32, #tpu.memory_space<vmem>>, vector<1x1xf32>
      %cst_35 = arith.constant 0.000000e+00 : f32
      %71 = vector.shape_cast %70 : vector<1x1xf32> to vector<1x1xf32>
      %72 = vector.broadcast %71 : vector<1x1xf32> to vector<8x128xf32>
      %73 = vector.broadcast %cst_35 : f32 to vector<8x128xf32>
      %74 = arith.select %69, %72, %73 : vector<8x128xi1>, vector<8x128xf32>
      %c0_i32_36 = arith.constant 0 : i32
      %75 = vector.broadcast %c0_i32_36 : i32 to vector<8x128xi32>
      %76 = arith.cmpi eq, %63, %75 : vector<8x128xi32>
      %c1_i32 = arith.constant 1 : i32
      %77 = vector.broadcast %c1_i32 : i32 to vector<8x128xi32>
      %78 = arith.cmpi eq, %64, %77 : vector<8x128xi32>
      %79 = arith.andi %76, %78 : vector<8x128xi1>
      %c0_37 = arith.constant 0 : index
      %c0_38 = arith.constant 0 : index
      %80 = vector.load %arg7[%c0_37, %c0_38] : memref<1x1xf32, #tpu.memory_space<vmem>>, vector<1x1xf32>
      %cst_39 = arith.constant 0.000000e+00 : f32
      %81 = vector.shape_cast %80 : vector<1x1xf32> to vector<1x1xf32>
      %82 = vector.broadcast %81 : vector<1x1xf32> to vector<8x128xf32>
      %83 = vector.broadcast %cst_39 : f32 to vector<8x128xf32>
      %84 = arith.select %79, %82, %83 : vector<8x128xi1>, vector<8x128xf32>
      %85 = arith.addf %74, %84 : vector<8x128xf32>
      %c0_40 = arith.constant 0 : index
      %c0_41 = arith.constant 0 : index
      %c0_42 = arith.constant 0 : index
      %86 = vector.load %arg5[%c0_40, %c0_41, %c0_42] : memref<1x8x128xf32, #tpu.memory_space<vmem>>, vector<1x8x128xf32>
      %87 = vector.shape_cast %86 : vector<1x8x128xf32> to vector<8x128xf32>
      %88 = vector.shape_cast %85 : vector<8x128xf32> to vector<1x8x128xf32>
      tpu.vector_store %arg5[%c0_40, %c0_41, %c0_42], %88 {strides = array<i32>} : memref<1x8x128xf32, #tpu.memory_space<vmem>>, vector<1x8x128xf32>,
    } else {
    }
    return
  }
  func.func @transform_0(%arg0: i32, %arg1: i32) -> (i32, i32) {
    %c1_i32 = arith.constant 1 : i32
    %0 = arith.muli %arg0, %c1_i32 : i32
    %1 = arith.addi %0, %arg1 : i32
    %c0_i32 = arith.constant 0 : i32
    %2 = arith.minsi %1, %c0_i32 : i32
    %c0_i32_0 = arith.constant 0 : i32
    %c0_i32_1 = arith.constant 0 : i32
    return %2, %c0_i32_0 : i32, i32
  }
  func.func @transform_1(%arg0: i32, %arg1: i32) -> (i32, i32) {
    %c1_i32 = arith.constant 1 : i32
    %0 = arith.muli %arg0, %c1_i32 : i32
    %1 = arith.addi %0, %arg1 : i32
    %c0_i32 = arith.constant 0 : i32
    %2 = arith.minsi %1, %c0_i32 : i32
    %c0_i32_0 = arith.constant 0 : i32
    %c0_i32_1 = arith.constant 0 : i32
    return %2, %c0_i32_0 : i32, i32
  }
  func.func @transform_2(%arg0: i32, %arg1: i32) -> (i32, i32) {
    %c1_i32 = arith.constant 1 : i32
    %0 = arith.muli %arg0, %c1_i32 : i32
    %1 = arith.addi %0, %arg1 : i32
    %c0_i32 = arith.constant 0 : i32
    %2 = arith.minsi %1, %c0_i32 : i32
    %c0_i32_0 = arith.constant 0 : i32
    %c0_i32_1 = arith.constant 0 : i32
    return %2, %c0_i32_0 : i32, i32
  }
  func.func @transform_3(%arg0: i32, %arg1: i32) -> (i32, i32, i32) {
    %c0_i32 = arith.constant 0 : i32
    %c0_i32_0 = arith.constant 0 : i32
    %c0_i32_1 = arith.constant 0 : i32
    return %arg0, %c0_i32, %c0_i32_0 : i32, i32, i32
  }
}

</mosaic_0001>

<llo_original>
// kernel: tpu_custom_call.1
$region0: #{tpu_custom_call.1}
  #allocation0 [shape = 'u32[]', space=smem, size = 0x4, offset = 0x4, fixed_abs, tag = 'smem constant byte address 0x4 - core index']
  #allocation1 [shape = 'u32[72,128]{1,0:T(1,128)}', space=vmem, size = 0x9000, scoped, tag = 'internal scratch']
  #allocation2 [shape = 'f32[1,1]{1,0:T(1,128)}', space=vmem, size = 0x200, scoped, tag = 'scratch operand']
  #allocation3 [shape = 'f32[1,1]{1,0:T(1,128)}', space=vmem, size = 0x200, scoped, tag = 'scratch operand']
  %s0 = inlined_call_operand.vmem [shape: f32[8,32], index: 0, kind: input, shape index: {}]
  %s1 = inlined_call_operand.hbm [shape: f32[8,32], index: 1, kind: input, shape index: {}]
  %s2 = inlined_call_operand.vmem [shape: s32[8,1], index: 2, kind: input, shape index: {}]
  %s3 = inlined_call_operand.hbm [shape: f32[1,8,128], index: 3, kind: output, shape index: {}]
  %s4 = sld [smem:[#allocation0]]
  $region34: #{tpu_custom_call.1} parent=0
    _
  %s6 = ssub.s32 1, %s4
  %s7 = scalar_select 0, %s6, %s4
  $region1: #{tpu_custom_call.1} parent=0
    #allocation4 [shape = 'u8[4096]{0}', space=vmem, size = 0x1000, scoped, tag = 'input window, operand 1, single buffered']
    #allocation5 [shape = 's32[1]{0}', space=sflag, size = 0x4, scoped, tag = 'scoped memory for tpu_custom_call.1']
    #allocation6 [shape = 's32[1]{0}', space=sflag, size = 0x4, scoped, tag = 'scoped memory for tpu_custom_call.1']
    #allocation7 [shape = 'u8[4096]{0}', space=vmem, size = 0x1000, scoped, tag = 'output window, operand 0, single buffered']
    %8 = vsyncpa [#allocation5], 0
    %9 = vsyncpa [#allocation6], 0
    // Predicated region
    $region2: #{tpu_custom_call.1} parent=1 // pred_check
      _
    $region3: #{tpu_custom_call.1} parent=1 // pred_check_branch
      %11 = sbr.rel (0) target = $region5
    $region4: #{tpu_custom_call.1} parent=1 // pred_region
      %s12 = sadd.s32 0, 0
      %p13 = scmp.lt.s32.totalorder %s12, 0
      %s14 = scalar_select %p13, %s12, 0
      %p15 = scmp.lt.s32.totalorder %s14, 0
      %s16 = scalar_select %p15, %s14, 0
      %s17 = smul.addr %s16, 8
      %s18 = scalar_lea.vmem %s0, %s17
      %s19 = sadd.s32 0, 0
      %p20 = scmp.lt.s32.totalorder %s19, 0
      %s21 = scalar_select %p20, %s19, 0
    $region5: #{tpu_custom_call.1} parent=1 // pred_fallthru
      _
    // Predicated region
    $region6: #{tpu_custom_call.1} parent=1 // pred_check
      _
    $region7: #{tpu_custom_call.1} parent=1 // pred_check_branch
      %23 = sbr.rel (0) target = $region9
    $region8: #{tpu_custom_call.1} parent=1 // pred_region
      %s24 = sadd.s32 0, 0
      %p25 = scmp.lt.s32.totalorder %s24, 0
      %s26 = scalar_select %p25, %s24, 0
      %28 = vsyncadd [#allocation5], 0
      %s29 = smul.addr %s26, 8
      %s30 = scalar_lea.hbm %s1, %s29
      %s32 = sshll.u32 %s30, 4
      %s33 = int_to_ptr.hbm [resolvable:$true] %s32
      %s34 = sshll.u32 [#allocation4], 4
      %s35 = int_to_ptr.vmem [resolvable:$true] %s34
      %37 = dma.hbm_to_vmem [thread:$0]  %s33, 128, %s35, [#allocation5]
    $region9: #{tpu_custom_call.1} parent=1 // pred_fallthru
      _
    // Predicated region
    $region10: #{tpu_custom_call.1} parent=1 // pred_check
      _
    $region11: #{tpu_custom_call.1} parent=1 // pred_check_branch
      %39 = sbr.rel (0) target = $region13
    $region12: #{tpu_custom_call.1} parent=1 // pred_region
      %s40 = sadd.s32 0, 0
      %p41 = scmp.lt.s32.totalorder %s40, 0
      %s42 = scalar_select %p41, %s40, 0
      %p43 = scmp.lt.s32.totalorder %s42, 0
      %s44 = scalar_select %p43, %s42, 0
      %s45 = smul.addr %s44, 8
      %s46 = scalar_lea.vmem %s2, %s45
      %s47 = sadd.s32 0, 0
      %p48 = scmp.lt.s32.totalorder %s47, 0
      %s49 = scalar_select %p48, %s47, 0
    $region13: #{tpu_custom_call.1} parent=1 // pred_fallthru
      _
    // Predicated region
    $region14: #{tpu_custom_call.1} parent=1 // pred_check
      _
    $region15: #{tpu_custom_call.1} parent=1 // pred_check_branch
      %51 = sbr.rel (0) target = $region17
    $region16: #{tpu_custom_call.1} parent=1 // pred_region
      %53 = dma.done [#allocation5], 128
    $region17: #{tpu_custom_call.1} parent=1 // pred_fallthru
      _
    %s54 = sadd.s32 0, 0
    %p55 = scmp.lt.s32.totalorder %s54, 0
    %s56 = scalar_select %p55, %s54, 0
    %p57 = scmp.lt.s32.totalorder %s56, 0
    %s58 = scalar_select %p57, %s56, 0
    %s59 = smul.addr %s58, 8
    %s60 = scalar_lea.vmem %s0, %s59
    %s61 = sadd.s32 0, 0
    %p62 = scmp.lt.s32.totalorder %s61, 0
    %s63 = scalar_select %p62, %s61, 0
    %p64 = scmp.lt.s32.totalorder %s63, 0
    %s65 = scalar_select %p64, %s63, 0
    %s66 = smul.addr %s65, 8
    %s67 = scalar_lea.vmem %s2, %s66
    %s68 = sadd.s32 0, 0
    %p69 = scmp.lt.s32.totalorder %s68, 0
    %s70 = scalar_select %p69, %s68, 0
    %p71 = scmp.lt.s32.totalorder %s70, 0
    %s72 = scalar_select %p71, %s70, 0
    %s73 = smul.addr %s72, 8
    %s74 = scalar_lea.vmem %s0, %s73
    %s75 = sadd.s32 0, 0
    %p76 = scmp.lt.s32.totalorder %s75, 0
    %s77 = scalar_select %p76, %s75, 0
    %s78 = sadd.s32 0, 0
    %p79 = scmp.lt.s32.totalorder %s78, 0
    %s80 = scalar_select %p79, %s78, 0
    %s81 = sadd.s32 0, 0
    %p82 = scmp.lt.s32.totalorder %s81, 0
    %s83 = scalar_select %p82, %s81, 0
    %p84 = scmp.lt.s32.totalorder %s83, 0
    %s85 = scalar_select %p84, %s83, 0
    %s86 = smul.addr %s85, 8
    %s87 = scalar_lea.vmem %s2, %s86
    %s88 = sadd.s32 0, 0
    %p89 = scmp.lt.s32.totalorder %s88, 0
    %s90 = scalar_select %p89, %s88, 0
    %p91 = scmp.eq.s32.totalorder 0, 0
    // Predicated region
    $region18: #{tpu_custom_call.1} parent=1 // pred_check
      %p92 = pneg %p91
    $region19: #{tpu_custom_call.1} parent=1 // pred_check_branch
      %94 = sbr.rel (%p92) target = $region21
    $region20: #{tpu_custom_call.1} parent=1 // pred_region
      %vm95 = vcmask 0
      %96 = vst.msk [vmem:[#allocation2] sm:$0x1] %vm95, 0.0
      %97 = vst.msk [vmem:[#allocation3] sm:$0x1] %vm95, 0.0
    $region21: #{tpu_custom_call.1} parent=1 // pred_fallthru
      _
    %v98 = vld [vmem:[%s74] sm:$0xff]
    %v99 = vld [vmem:[#allocation4] sm:$0xff]
    %v100 = vld [vmem:[%s87] sm:$0xff]
    %vm101 = vcmask 261120
    %v102 = vsel %vm101, %v98, -inf
    %103 = vmax.xlane.f32.xlu0 %v102
    %v104 = vpop.xlane.xlu0 %103
    %v105 = vsub.f32 %v98, %v104
    %v106 = vmul.f32 %v105, 1.442695
    %v107 = vpow.pop %v106
    %v109 = vsel %vm101, %v107, 0
    %111 = vmatpush.msra.mxu0 0.0
    %112 = vmatpush.msra.mxu0 0.0
    %113 = vmatpush.msra.mxu0 0.0
    %114 = vmatpush.msra.mxu0 0.0
    %115 = vmatpush.msra.mxu0 0.0
    %116 = vmatpush.msra.mxu0 0.0
    %117 = vmatpush.msra.mxu0 0.0
    %118 = vmatpush.msra.mxu0 0.0
    %119 = vmatpush.msra.mxu0 0.0
    %120 = vmatpush.msra.mxu0 0.0
    %121 = vmatpush.msra.mxu0 0.0
    %122 = vmatpush.msra.mxu0 0.0
    %123 = vmatpush.msra.mxu0 1.0
    %124 = vmatpush.msra.mxu0 1.0
    %125 = vmatpush.msra.mxu0 1.0
    %126 = vmatpush.msra.mxu0 1.0
    %127 = vmatmul.f32.gmra.mxu0 %v109
    %v128 = vpop.f32.mrf.mxu0
    %v129 = vadd.f32 0.0, %v128
    %130 = vdwg.mxu0
    %v131 = vlog2.pop %v129
    %v132 = vmul.f32 %v131, 0.6931472
    %v133 = vadd.f32 %v132, %v104
    %v134 = vlaneseq
    %v135 = vand.u32 %v134, 127
    %136 = vset.pattern.permute.xlu0 0
    %137 = vperm.xlu0 %136, %v100
    %v138 = vpop.permute.xlu0 %137
    %vm139 = vcmp.eq.s32.totalorder %v135, %v138
    %v140 = vsel %vm139, %v98, 0.0
    %v142 = vsel %vm101, %v140, 0
    %144 = vmatpush.msra.mxu0 0.0
    %145 = vmatpush.msra.mxu0 0.0
    %146 = vmatpush.msra.mxu0 0.0
    %147 = vmatpush.msra.mxu0 0.0
    %148 = vmatpush.msra.mxu0 0.0
    %149 = vmatpush.msra.mxu0 0.0
    %150 = vmatpush.msra.mxu0 0.0
    %151 = vmatpush.msra.mxu0 0.0
    %152 = vmatpush.msra.mxu0 0.0
    %153 = vmatpush.msra.mxu0 0.0
    %154 = vmatpush.msra.mxu0 0.0
    %155 = vmatpush.msra.mxu0 0.0
    %156 = vmatpush.msra.mxu0 1.0
    %157 = vmatpush.msra.mxu0 1.0
    %158 = vmatpush.msra.mxu0 1.0
    %159 = vmatpush.msra.mxu0 1.0
    %160 = vmatmul.f32.gmra.mxu0 %v142
    %v161 = vpop.f32.mrf.mxu0
    %v162 = vadd.f32 0.0, %v161
    %163 = vdwg.mxu0
    %v164 = vsub.f32 %v133, %v162
    %v165 = vmul.f32 %v105, 0.5
    %v166 = vmul.f32 %v165, 1.442695
    %v167 = vpow.pop %v166
    %v169 = vsel %vm101, %v167, 0
    %171 = vmatpush.msra.mxu0 0.0
    %172 = vmatpush.msra.mxu0 0.0
    %173 = vmatpush.msra.mxu0 0.0
    %174 = vmatpush.msra.mxu0 0.0
    %175 = vmatpush.msra.mxu0 0.0
    %176 = vmatpush.msra.mxu0 0.0
    %177 = vmatpush.msra.mxu0 0.0
    %178 = vmatpush.msra.mxu0 0.0
    %179 = vmatpush.msra.mxu0 0.0
    %180 = vmatpush.msra.mxu0 0.0
    %181 = vmatpush.msra.mxu0 0.0
    %182 = vmatpush.msra.mxu0 0.0
    %183 = vmatpush.msra.mxu0 1.0
    %184 = vmatpush.msra.mxu0 1.0
    %185 = vmatpush.msra.mxu0 1.0
    %186 = vmatpush.msra.mxu0 1.0
    %187 = vmatmul.f32.gmra.mxu0 %v169
    %v188 = vpop.f32.mrf.mxu0
    %v189 = vadd.f32 0.0, %v188
    %190 = vdwg.mxu0
    %v191 = vlog2.pop %v189
    %v192 = vmul.f32 %v191, 0.6931472
    %v193 = vmul.f32 %v104, 0.5
    %v194 = vadd.f32 %v192, %v193
    %v195 = vsel %vm101, %v99, -inf
    %196 = vmax.xlane.f32.xlu0 %v195
    %v197 = vpop.xlane.xlu0 %196
    %v198 = vsub.f32 %v99, %v197
    %v199 = vmul.f32 %v198, 0.5
    %v200 = vmul.f32 %v199, 1.442695
    %v201 = vpow.pop %v200
    %v203 = vsel %vm101, %v201, 0
    %205 = vmatpush.msra.mxu0 0.0
    %206 = vmatpush.msra.mxu0 0.0
    %207 = vmatpush.msra.mxu0 0.0
    %208 = vmatpush.msra.mxu0 0.0
    %209 = vmatpush.msra.mxu0 0.0
    %210 = vmatpush.msra.mxu0 0.0
    %211 = vmatpush.msra.mxu0 0.0
    %212 = vmatpush.msra.mxu0 0.0
    %213 = vmatpush.msra.mxu0 0.0
    %214 = vmatpush.msra.mxu0 0.0
    %215 = vmatpush.msra.mxu0 0.0
    %216 = vmatpush.msra.mxu0 0.0
    %217 = vmatpush.msra.mxu0 1.0
    %218 = vmatpush.msra.mxu0 1.0
    %219 = vmatpush.msra.mxu0 1.0
    %220 = vmatpush.msra.mxu0 1.0
    %221 = vmatmul.f32.gmra.mxu0 %v203
    %v222 = vpop.f32.mrf.mxu0
    %v223 = vadd.f32 0.0, %v222
    %224 = vdwg.mxu0
    %v225 = vlog2.pop %v223
    %v226 = vmul.f32 %v225, 0.6931472
    %v227 = vmul.f32 %v197, 0.5
    %v228 = vadd.f32 %v226, %v227
    %v229 = vsub.f32 %v99, %v98
    %v230 = vmul.f32 %v201, %v229
    %v232 = vsel %vm101, %v230, 0
    %234 = vmatpush.msra.mxu0 0.0
    %235 = vmatpush.msra.mxu0 0.0
    %236 = vmatpush.msra.mxu0 0.0
    %237 = vmatpush.msra.mxu0 0.0
    %238 = vmatpush.msra.mxu0 0.0
    %239 = vmatpush.msra.mxu0 0.0
    %240 = vmatpush.msra.mxu0 0.0
    %241 = vmatpush.msra.mxu0 0.0
    %242 = vmatpush.msra.mxu0 0.0
    %243 = vmatpush.msra.mxu0 0.0
    %244 = vmatpush.msra.mxu0 0.0
    %245 = vmatpush.msra.mxu0 0.0
    %246 = vmatpush.msra.mxu0 1.0
    %247 = vmatpush.msra.mxu0 1.0
    %248 = vmatpush.msra.mxu0 1.0
    %249 = vmatpush.msra.mxu0 1.0
    %250 = vmatmul.f32.gmra.mxu0 %v232
    %v251 = vpop.f32.mrf.mxu0
    %v252 = vadd.f32 0.0, %v251
    %253 = vdwg.mxu0
    %v254 = vrcp.pop %v223
    %v255 = vmul.f32 %v223, %v254
    %v256 = vsub.f32 1.0, %v255
    %v257 = vmul.f32 %v254, %v256
    %v258 = vadd.f32 %v254, %v257
    %vm259 = vweird.f32 %v223
    %vm260 = vweird.f32 %v254
    %vm261 = vmor %vm259, %vm260
    %v262 = vsel %vm261, %v254, %v258
    %v263 = vand.u32 2147483647, %v223
    %vm264 = vcmp.eq.f32.partialorder %v263, 8.507059e+37
    %v265 = vand.u32 %v223, 2147483648
    %v266 = vor.u32 1.1754944e-38, %v265
    %v267 = vsel %vm264, %v266, %v262
    %v268 = vmul.f32 %v252, %v267
    %v269 = vmul.f32 %v268, 0.5
    %v270 = vsub.f32 %v228, %v194
    %v271 = vsub.f32 %v269, %v270
    %v272 = vld [vmem:[#allocation2] sm:$0x1]
    %vm273 = vcmask 7168
    %v274 = vsel %vm273, %v164, 0.0
    %v275 = vrot.slane %v274, 4
    %v276 = vadd.f32 %v274, %v275
    %v277 = vrot.slane %v276, 2
    %v278 = vadd.f32 %v276, %v277
    %v279 = vrot.slane %v278, 1
    %v280 = vadd.f32 %v278, %v279
    %v281 = vadd.f32 %v272, %v280
    %vm282 = vcmask 0
    %283 = vst.msk [vmem:[#allocation2] sm:$0x1] %vm282, %v281
    %v284 = vld [vmem:[#allocation3] sm:$0x1]
    %v285 = vsel %vm273, %v271, 0.0
    %v286 = vrot.slane %v285, 4
    %v287 = vadd.f32 %v285, %v286
    %v288 = vrot.slane %v287, 2
    %v289 = vadd.f32 %v287, %v288
    %v290 = vrot.slane %v289, 1
    %v291 = vadd.f32 %v289, %v290
    %v292 = vadd.f32 %v284, %v291
    %293 = vst.msk [vmem:[#allocation3] sm:$0x1] %vm282, %v292
    // Predicated region
    $region22: #{tpu_custom_call.1} parent=1 // pred_check
      %p294 = pneg %p91
    $region23: #{tpu_custom_call.1} parent=1 // pred_check_branch
      %296 = sbr.rel (%p294) target = $region25
    $region24: #{tpu_custom_call.1} parent=1 // pred_region
      %v297 = vlaneseq
      %v298 = vshrl.u32 %v297, 7
      %vm299 = vcmp.eq.s32.totalorder %v298, 0
      %vm300 = vcmp.eq.s32.totalorder %v135, 0
      %vm301 = vmand %vm299, %vm300
      %v302 = vld [vmem:[#allocation2] sm:$0x1]
      %v304 = vperm.slane %v302, 0
      %305 = vset.pattern.permute.xlu0 0
      %306 = vperm.xlu0 %305, %v304
      %v307 = vpop.permute.xlu0 %306
      %v309 = vsel %vm301, %v307, 0.0
      %vm310 = vcmp.eq.s32.totalorder %v135, 1
      %vm311 = vmand %vm299, %vm310
      %v312 = vld [vmem:[#allocation3] sm:$0x1]
      %v314 = vperm.slane %v312, 0
      %315 = vset.pattern.permute.xlu0 0
      %316 = vperm.xlu0 %315, %v314
      %v317 = vpop.permute.xlu0 %316
      %v319 = vsel %vm311, %v317, 0.0
      %v320 = vadd.f32 %v309, %v319
      %321 = vst [vmem:[#allocation7] sm:$0xff] %v320
    $region25: #{tpu_custom_call.1} parent=1 // pred_fallthru
      _
    // Predicated region
    $region26: #{tpu_custom_call.1} parent=1 // pred_check
      _
    $region27: #{tpu_custom_call.1} parent=1 // pred_check_branch
      %323 = sbr.rel (0) target = $region29
    $region28: #{tpu_custom_call.1} parent=1 // pred_region
      %325 = vsyncadd [#allocation6], 0
      %s327 = sshll.u32 [#allocation7], 4
      %s328 = int_to_ptr.vmem [resolvable:$true] %s327
      %s329 = sshll.u32 %s3, 4
      %s330 = int_to_ptr.hbm [resolvable:$true] %s329
      %332 = dma.vmem_to_hbm [thread:$0]  %s328, 128, %s330, [#allocation6]
    $region29: #{tpu_custom_call.1} parent=1 // pred_fallthru
      _
    // Predicated region
    $region30: #{tpu_custom_call.1} parent=1 // pred_check
      _
    $region31: #{tpu_custom_call.1} parent=1 // pred_check_branch
      %334 = sbr.rel (0) target = $region33
    $region32: #{tpu_custom_call.1} parent=1 // pred_region
      %336 = dma.done [#allocation6], 128
    $region33: #{tpu_custom_call.1} parent=1 // pred_fallthru
      _
    %337 = vsyncpa [#allocation5], 1
    %338 = vsyncpa [#allocation6], 1

</llo_original>
